<compile_context>
chip_gen: v7x
topology: tpu7x:2x2x1
jax: 0.10.0
libtpu: 0.0.40
codegen_flags: <defaults>
</compile_context>

<pallas_src>
import jax
import jax.numpy as jnp
from jax.experimental import pallas as pl
from jax.experimental.pallas import tpu as pltpu

BN_EPS = 1e-5

# Row layout of the packed per-feature-vector operand (shape (8, d_rep)):
#   0: gamma1   1: beta1   2: gamma2   3: beta2
#   4: w3 row (the single output column of l3, laid out along lanes)
#   5: b3 broadcast across lanes      6,7: zero padding (natural (8,128) tile)
_ROW_G1, _ROW_BE1, _ROW_G2, _ROW_BE2, _ROW_W3, _ROW_B3 = 0, 1, 2, 3, 4, 5


def _mlp_regress_kernel(x_ref, w1_ref, w2_ref, vec_ref, o_ref):
    x = x_ref[...].astype(jnp.float32)

    g1 = vec_ref[_ROW_G1:_ROW_G1 + 1, :]
    be1 = vec_ref[_ROW_BE1:_ROW_BE1 + 1, :]
    g2 = vec_ref[_ROW_G2:_ROW_G2 + 1, :]
    be2 = vec_ref[_ROW_BE2:_ROW_BE2 + 1, :]
    w3 = vec_ref[_ROW_W3:_ROW_W3 + 1, :]
    b3 = vec_ref[_ROW_B3:_ROW_B3 + 1, 0:1]          # (1, 1)

    # ---- layer 1: Linear (bias dropped: BN cancels it) + fused BN + ReLU ----
    h = jnp.dot(x, w1_ref[...], preferred_element_type=jnp.float32)
    mu = jnp.mean(h, axis=0, keepdims=True)
    var = jnp.mean((h - mu) * (h - mu), axis=0, keepdims=True)   # biased variance
    scale = g1 * jax.lax.rsqrt(var + BN_EPS)
    shift = be1 - mu * scale
    h = jnp.maximum(h * scale + shift, 0.0)

    # ---- layer 2: Linear (bias dropped) + fused BN + ReLU ----
    h = jnp.dot(h, w2_ref[...], preferred_element_type=jnp.float32)
    mu = jnp.mean(h, axis=0, keepdims=True)
    var = jnp.mean((h - mu) * (h - mu), axis=0, keepdims=True)
    scale = g2 * jax.lax.rsqrt(var + BN_EPS)
    shift = be2 - mu * scale
    h = jnp.maximum(h * scale + shift, 0.0)

    # ---- layer 3: Linear(d_rep -> 1) via VPU multiply + lane (XLU) reduction ----
    o = jnp.sum(h * w3, axis=-1, keepdims=True) + b3
    o_ref[...] = o.astype(o_ref.dtype)


def mlp_regress_forward(x, params):
    """x: (B, d_rep) float32.  params: dict of pre-transposed weights."""
    B, D = x.shape

    # Pack the six small per-feature vectors into one (8, D) f32 operand.
    w3_row = params["w3"].reshape(1, D)               # (D,1) column -> (1,D) row
    b3_row = jnp.broadcast_to(params["b3"], (1, D))
    packed_vec = jnp.concatenate(
        [params["g1"], params["be1"], params["g2"], params["be2"],
         w3_row, b3_row, jnp.zeros((2, D), jnp.float32)], axis=0)   # (8, D)

    args = (x, params["w1"], params["w2"], packed_vec)

    # Small problem: everything resident in VMEM, single kernel invocation.
    vmem_spec = pl.BlockSpec(memory_space=pltpu.MemorySpace.VMEM)
    return pl.pallas_call(
        _mlp_regress_kernel,
        out_shape=jax.ShapeDtypeStruct((B, 1), jnp.float32),
        in_specs=[vmem_spec] * len(args),
        out_specs=vmem_spec,
    )(*args)


def init_params(key, d_rep):
    """Deterministic init mimicking PyTorch Linear default U(-1/sqrt(in), 1/sqrt(in))."""
    ks = jax.random.split(key, 6)
    bound = 1.0 / jnp.sqrt(jnp.float32(d_rep))

    def lin(kw, kb, d_in, d_out):
        w = jax.random.uniform(kw, (d_in, d_out), jnp.float32, -bound, bound)  # (in, out)
        b = jax.random.uniform(kb, (1, d_out), jnp.float32, -bound, bound)
        return w, b

    w1, b1 = lin(ks[0], ks[1], d_rep, d_rep)
    w2, b2 = lin(ks[2], ks[3], d_rep, d_rep)
    w3, b3 = lin(ks[4], ks[5], d_rep, 1)
    return {
        "w1": w1, "b1": b1,
        "g1": jnp.ones((1, d_rep), jnp.float32), "be1": jnp.zeros((1, d_rep), jnp.float32),
        "w2": w2, "b2": b2,
        "g2": jnp.ones((1, d_rep), jnp.float32), "be2": jnp.zeros((1, d_rep), jnp.float32),
        "w3": w3, "b3": b3,
    }


def reference_forward(x, p):
    """Plain-JAX reference of the PyTorch forward (training-mode BN), biases included."""
    def bn(h, g, be):
        mu = jnp.mean(h, axis=0, keepdims=True)
        var = jnp.mean((h - mu) ** 2, axis=0, keepdims=True)
        return (h - mu) / jnp.sqrt(var + BN_EPS) * g + be

    h = x @ p["w1"] + p["b1"]
    h = jnp.maximum(bn(h, p["g1"], p["be1"]), 0.0)
    h = h @ p["w2"] + p["b2"]
    h = jnp.maximum(bn(h, p["g2"], p["be2"]), 0.0)
    return h @ p["w3"] + p["b3"]


if __name__ == "__main__":
    key = jax.random.PRNGKey(0)
    k_x, k_p = jax.random.split(key)

    B, d_rep = 8, 32
    x = jax.random.normal(k_x, (B, d_rep), jnp.float32)
    params = init_params(k_p, d_rep)

    out = mlp_regress_forward(x, params)
    out = jax.block_until_ready(out)

    ref = reference_forward(x, params)
    assert out.shape == (B, 1), out.shape
    assert jnp.allclose(out, ref, atol=1e-4, rtol=1e-4), (out, ref)

    print("KERNEL_OK")
</pallas_src>

<mosaic_0001>
module attributes {stable_mosaic.version = 11 : i64} {
  func.func @_mlp_regress_kernel(%arg0: memref<8x32xf32, #tpu.memory_space<vmem>>, %arg1: memref<32x32xf32, #tpu.memory_space<vmem>>, %arg2: memref<32x32xf32, #tpu.memory_space<vmem>>, %arg3: memref<8x32xf32, #tpu.memory_space<vmem>>, %arg4: memref<8x1xf32, #tpu.memory_space<vmem>>) attributes {dimension_semantics = [], scalar_prefetch = 0 : i64, scratch_operands = 0 : i64, tpu.core_type = #tpu.core_type<tc>} {
    %c0 = arith.constant 0 : index
    %c0_0 = arith.constant 0 : index
    %0 = vector.load %arg0[%c0, %c0_0] : memref<8x32xf32, #tpu.memory_space<vmem>>, vector<8x32xf32>
    %c0_1 = arith.constant 0 : index
    %c0_2 = arith.constant 0 : index
    %1 = vector.load %arg3[%c0_1, %c0_2] : memref<8x32xf32, #tpu.memory_space<vmem>>, vector<1x32xf32>
    %c1 = arith.constant 1 : index
    %c0_3 = arith.constant 0 : index
    %2 = vector.load %arg3[%c1, %c0_3] : memref<8x32xf32, #tpu.memory_space<vmem>>, vector<1x32xf32>
    %c2 = arith.constant 2 : index
    %c0_4 = arith.constant 0 : index
    %3 = vector.load %arg3[%c2, %c0_4] : memref<8x32xf32, #tpu.memory_space<vmem>>, vector<1x32xf32>
    %c3 = arith.constant 3 : index
    %c0_5 = arith.constant 0 : index
    %4 = vector.load %arg3[%c3, %c0_5] : memref<8x32xf32, #tpu.memory_space<vmem>>, vector<1x32xf32>
    %c4 = arith.constant 4 : index
    %c0_6 = arith.constant 0 : index
    %5 = vector.load %arg3[%c4, %c0_6] : memref<8x32xf32, #tpu.memory_space<vmem>>, vector<1x32xf32>
    %c5 = arith.constant 5 : index
    %c0_7 = arith.constant 0 : index
    %6 = vector.load %arg3[%c5, %c0_7] : memref<8x32xf32, #tpu.memory_space<vmem>>, vector<1x1xf32>
    %c0_8 = arith.constant 0 : index
    %c0_9 = arith.constant 0 : index
    %7 = vector.load %arg1[%c0_8, %c0_9] : memref<32x32xf32, #tpu.memory_space<vmem>>, vector<32x32xf32>
    %cst = arith.constant dense<0.000000e+00> : vector<8x32xf32>
    %8 = tpu.matmul %0, %7, %cst {dimension_numbers = #tpu.dot_dimension_numbers<[1], [0], [0], [1], [0, 0, 1, 1], [], []>} : vector<8x32xf32>, vector<32x32xf32>, vector<8x32xf32> -> vector<8x32xf32>
    %cst_10 = arith.constant dense<0.000000e+00> : vector<32xf32>
    %9 = vector.multi_reduction <add>, %8, %cst_10 [0] : vector<8x32xf32> to vector<32xf32>
    %10 = vector.shape_cast %9 : vector<32xf32> to vector<1x32xf32>
    %cst_11 = arith.constant 8.000000e+00 : f32
    %11 = vector.broadcast %cst_11 : f32 to vector<1x32xf32>
    %12 = arith.divf %10, %11 : vector<1x32xf32>
    %13 = vector.broadcast %12 : vector<1x32xf32> to vector<8x32xf32>
    %14 = arith.subf %8, %13 : vector<8x32xf32>
    %15 = vector.broadcast %12 : vector<1x32xf32> to vector<8x32xf32>
    %16 = arith.subf %8, %15 : vector<8x32xf32>
    %17 = arith.mulf %14, %16 : vector<8x32xf32>
    %cst_12 = arith.constant dense<0.000000e+00> : vector<32xf32>
    %18 = vector.multi_reduction <add>, %17, %cst_12 [0] : vector<8x32xf32> to vector<32xf32>
    %19 = vector.shape_cast %18 : vector<32xf32> to vector<1x32xf32>
    %cst_13 = arith.constant 8.000000e+00 : f32
    %20 = vector.broadcast %cst_13 : f32 to vector<1x32xf32>
    %21 = arith.divf %19, %20 : vector<1x32xf32>
    %cst_14 = arith.constant 9.99999974E-6 : f32
    %22 = vector.broadcast %cst_14 : f32 to vector<1x32xf32>
    %23 = arith.addf %21, %22 : vector<1x32xf32>
    %24 = math.rsqrt %23 : vector<1x32xf32>
    %25 = arith.mulf %1, %24 : vector<1x32xf32>
    %26 = arith.mulf %12, %25 : vector<1x32xf32>
    %27 = arith.subf %2, %26 : vector<1x32xf32>
    %28 = vector.broadcast %25 : vector<1x32xf32> to vector<8x32xf32>
    %29 = arith.mulf %8, %28 : vector<8x32xf32>
    %30 = vector.broadcast %27 : vector<1x32xf32> to vector<8x32xf32>
    %31 = arith.addf %29, %30 : vector<8x32xf32>
    %cst_15 = arith.constant 0.000000e+00 : f32
    %32 = vector.broadcast %cst_15 : f32 to vector<8x32xf32>
    %33 = arith.maximumf %31, %32 : vector<8x32xf32>
    %c0_16 = arith.constant 0 : index
    %c0_17 = arith.constant 0 : index
    %34 = vector.load %arg2[%c0_16, %c0_17] : memref<32x32xf32, #tpu.memory_space<vmem>>, vector<32x32xf32>
    %cst_18 = arith.constant dense<0.000000e+00> : vector<8x32xf32>
    %35 = tpu.matmul %33, %34, %cst_18 {dimension_numbers = #tpu.dot_dimension_numbers<[1], [0], [0], [1], [0, 0, 1, 1], [], []>} : vector<8x32xf32>, vector<32x32xf32>, vector<8x32xf32> -> vector<8x32xf32>
    %cst_19 = arith.constant dense<0.000000e+00> : vector<32xf32>
    %36 = vector.multi_reduction <add>, %35, %cst_19 [0] : vector<8x32xf32> to vector<32xf32>
    %37 = vector.shape_cast %36 : vector<32xf32> to vector<1x32xf32>
    %cst_20 = arith.constant 8.000000e+00 : f32
    %38 = vector.broadcast %cst_20 : f32 to vector<1x32xf32>
    %39 = arith.divf %37, %38 : vector<1x32xf32>
    %40 = vector.broadcast %39 : vector<1x32xf32> to vector<8x32xf32>
    %41 = arith.subf %35, %40 : vector<8x32xf32>
    %42 = vector.broadcast %39 : vector<1x32xf32> to vector<8x32xf32>
    %43 = arith.subf %35, %42 : vector<8x32xf32>
    %44 = arith.mulf %41, %43 : vector<8x32xf32>
    %cst_21 = arith.constant dense<0.000000e+00> : vector<32xf32>
    %45 = vector.multi_reduction <add>, %44, %cst_21 [0] : vector<8x32xf32> to vector<32xf32>
    %46 = vector.shape_cast %45 : vector<32xf32> to vector<1x32xf32>
    %cst_22 = arith.constant 8.000000e+00 : f32
    %47 = vector.broadcast %cst_22 : f32 to vector<1x32xf32>
    %48 = arith.divf %46, %47 : vector<1x32xf32>
    %cst_23 = arith.constant 9.99999974E-6 : f32
    %49 = vector.broadcast %cst_23 : f32 to vector<1x32xf32>
    %50 = arith.addf %48, %49 : vector<1x32xf32>
    %51 = math.rsqrt %50 : vector<1x32xf32>
    %52 = arith.mulf %3, %51 : vector<1x32xf32>
    %53 = arith.mulf %39, %52 : vector<1x32xf32>
    %54 = arith.subf %4, %53 : vector<1x32xf32>
    %55 = vector.broadcast %52 : vector<1x32xf32> to vector<8x32xf32>
    %56 = arith.mulf %35, %55 : vector<8x32xf32>
    %57 = vector.broadcast %54 : vector<1x32xf32> to vector<8x32xf32>
    %58 = arith.addf %56, %57 : vector<8x32xf32>
    %cst_24 = arith.constant 0.000000e+00 : f32
    %59 = vector.broadcast %cst_24 : f32 to vector<8x32xf32>
    %60 = arith.maximumf %58, %59 : vector<8x32xf32>
    %61 = vector.broadcast %5 : vector<1x32xf32> to vector<8x32xf32>
    %62 = arith.mulf %60, %61 : vector<8x32xf32>
    %cst_25 = arith.constant dense<0.000000e+00> : vector<8xf32>
    %63 = vector.multi_reduction <add>, %62, %cst_25 [1] : vector<8x32xf32> to vector<8xf32>
    %64 = vector.shape_cast %63 : vector<8xf32> to vector<8x1xf32>
    %65 = vector.broadcast %6 : vector<1x1xf32> to vector<8x1xf32>
    %66 = arith.addf %64, %65 : vector<8x1xf32>
    %c0_26 = arith.constant 0 : index
    %c0_27 = arith.constant 0 : index
    %67 = vector.load %arg4[%c0_26, %c0_27] : memref<8x1xf32, #tpu.memory_space<vmem>>, vector<8x1xf32>
    tpu.vector_store %arg4[%c0_26, %c0_27], %66 {strides = array<i32>} : memref<8x1xf32, #tpu.memory_space<vmem>>, vector<8x1xf32>,
    return
  }
}

</mosaic_0001>

<llo_original>
// kernel: tpu_custom_call.1
$region0: #{tpu_custom_call.1}
  #allocation0 [shape = 'u32[]', space=smem, size = 0x4, offset = 0x4, fixed_abs, tag = 'smem constant byte address 0x4 - core index']
  #allocation1 [shape = 'u32[144,128]{1,0:T(1,128)}', space=vmem, size = 0x12000, scoped, tag = 'internal scratch']
  %s0 = inlined_call_operand.hbm [shape: f32[8,32], index: 0, kind: input, shape index: {}]
  %s1 = inlined_call_operand.hbm [shape: f32[32,32], index: 1, kind: input, shape index: {}]
  %s2 = inlined_call_operand.hbm [shape: f32[32,32], index: 2, kind: input, shape index: {}]
  %s3 = inlined_call_operand.vmem [shape: f32[8,32], index: 3, kind: input, shape index: {}]
  %s4 = inlined_call_operand.vmem [shape: f32[8,1], index: 4, kind: output, shape index: {}]
  %s5 = sld [smem:[#allocation0]]
  $region38: #{tpu_custom_call.1} parent=0
    _
  %s7 = ssub.s32 1, %s5
  %s8 = scalar_select 0, %s7, %s5
  $region1: #{tpu_custom_call.1} parent=0
    #allocation2 [shape = 'u8[4096]{0}', space=vmem, size = 0x1000, scoped, tag = 'input window, operand 0, single buffered']
    #allocation3 [shape = 's32[1]{0}', space=sflag, size = 0x4, scoped, tag = 'scoped memory for tpu_custom_call.1']
    #allocation4 [shape = 'u8[16384]{0}', space=vmem, size = 0x4000, scoped, tag = 'input window, operand 1, single buffered']
    #allocation5 [shape = 's32[1]{0}', space=sflag, size = 0x4, scoped, tag = 'scoped memory for tpu_custom_call.1']
    #allocation6 [shape = 'u8[16384]{0}', space=vmem, size = 0x4000, scoped, tag = 'input window, operand 2, single buffered']
    %9 = vsyncpa [#allocation3], 0
    %10 = vsyncpa [#allocation5], 0
    // Predicated region
    $region2: #{tpu_custom_call.1} parent=1 // pred_check
      _
    $region3: #{tpu_custom_call.1} parent=1 // pred_check_branch
      %12 = sbr.rel (0) target = $region5
    $region4: #{tpu_custom_call.1} parent=1 // pred_region
      %s14 = ssub.s32 128, 128
      %15 = vsyncadd [#allocation3], %s14
      %s17 = sshll.u32 [#allocation2], 4
      %s18 = int_to_ptr.vmem [resolvable:$true] %s17
      %20 = dma.hbm_to_vmem [thread:$0]  %s0, 128, %s18, [#allocation3]
    $region5: #{tpu_custom_call.1} parent=1 // pred_fallthru
      _
    // Predicated region
    $region6: #{tpu_custom_call.1} parent=1 // pred_check
      _
    $region7: #{tpu_custom_call.1} parent=1 // pred_check_branch
      %22 = sbr.rel (0) target = $region9
    $region8: #{tpu_custom_call.1} parent=1 // pred_region
      %s24 = ssub.s32 512, 512
      %25 = vsyncadd [#allocation5], %s24
      %s26 = sshll.u32 [#allocation4], 4
      %s27 = int_to_ptr.vmem [resolvable:$true] %s26
      %32 = dma.hbm_to_vmem [thread:$0]  %s1, 512, %s27, [#allocation5], 128, 128, 8
    $region9: #{tpu_custom_call.1} parent=1 // pred_fallthru
      _
    // Predicated region
    $region10: #{tpu_custom_call.1} parent=1 // pred_check
      _
    $region11: #{tpu_custom_call.1} parent=1 // pred_check_branch
      %34 = sbr.rel (0) target = $region13
    $region12: #{tpu_custom_call.1} parent=1 // pred_region
      %s36 = ssub.s32 512, 512
      %37 = vsyncadd [#allocation5], %s36
      %s38 = sshll.u32 [#allocation6], 4
      %s39 = int_to_ptr.vmem [resolvable:$true] %s38
      %44 = dma.hbm_to_vmem [thread:$0]  %s2, 512, %s39, [#allocation5], 128, 128, 8
    $region13: #{tpu_custom_call.1} parent=1 // pred_fallthru
      _
    // Predicated region
    $region14: #{tpu_custom_call.1} parent=1 // pred_check
      _
    $region15: #{tpu_custom_call.1} parent=1 // pred_check_branch
      %46 = sbr.rel (0) target = $region17
    $region16: #{tpu_custom_call.1} parent=1 // pred_region
      _
    $region17: #{tpu_custom_call.1} parent=1 // pred_fallthru
      _
    // Predicated region
    $region18: #{tpu_custom_call.1} parent=1 // pred_check
      _
    $region19: #{tpu_custom_call.1} parent=1 // pred_check_branch
      %48 = sbr.rel (0) target = $region21
    $region20: #{tpu_custom_call.1} parent=1 // pred_region
      %49 = dma.done [#allocation3], 128
    $region21: #{tpu_custom_call.1} parent=1 // pred_fallthru
      _
    // Predicated region
    $region22: #{tpu_custom_call.1} parent=1 // pred_check
      _
    $region23: #{tpu_custom_call.1} parent=1 // pred_check_branch
      %51 = sbr.rel (0) target = $region25
    $region24: #{tpu_custom_call.1} parent=1 // pred_region
      %52 = dma.done [#allocation5], 512
    $region25: #{tpu_custom_call.1} parent=1 // pred_fallthru
      _
    // Predicated region
    $region26: #{tpu_custom_call.1} parent=1 // pred_check
      _
    $region27: #{tpu_custom_call.1} parent=1 // pred_check_branch
      %54 = sbr.rel (0) target = $region29
    $region28: #{tpu_custom_call.1} parent=1 // pred_region
      %55 = dma.done [#allocation5], 512
    $region29: #{tpu_custom_call.1} parent=1 // pred_fallthru
      _
    %v56 = vld [vmem:[#allocation2] sm:$0xff]
    %v57 = vld [vmem:[%s3] sm:$0x1]
    %v58 = vld [vmem:[%s3 + $0x1] sm:$0x1]
    %v59 = vld [vmem:[%s3 + $0x2] sm:$0x1]
    %v60 = vld [vmem:[%s3 + $0x3] sm:$0x1]
    %v61 = vld [vmem:[%s3 + $0x4] sm:$0x1]
    %v62 = vld [vmem:[%s3 + $0x5] sm:$0x1]
    %v63 = vld [vmem:[#allocation4] sm:$0xff]
    %v64 = vld [vmem:[#allocation4 + $0x8] sm:$0xff]
    %v65 = vld [vmem:[#allocation4 + $0x10] sm:$0xff]
    %v66 = vld [vmem:[#allocation4 + $0x18] sm:$0xff]
    %vm67 = vcmask 261120
    %v69 = vsel %vm67, %v56, 0
    %71 = vmatprep.subr.mxu0 0.0
    %72 = vmatpush1.msra.mxu0 %v63
    %73 = vmatprep.subr.mxu0 0.0
    %74 = vmatpush1.msra.mxu0 %v64
    %75 = vmatprep.subr.mxu0 0.0
    %76 = vmatpush1.msra.mxu0 %v65
    %77 = vmatprep.subr.mxu0 0.0
    %78 = vmatpush1.msra.mxu0 %v66
    %79 = vmatprep.subr.mxu0 0.0
    %80 = vmatpush1.msra.mxu0 0.0
    %81 = vmatprep.subr.mxu0 0.0
    %82 = vmatpush1.msra.mxu0 0.0
    %83 = vmatprep.subr.mxu0 0.0
    %84 = vmatpush1.msra.mxu0 0.0
    %85 = vmatprep.subr.mxu0 0.0
    %86 = vmatpush1.msra.mxu0 0.0
    %87 = vmatprep.subr.mxu0 0.0
    %88 = vmatpush1.msra.mxu0 0.0
    %89 = vmatprep.subr.mxu0 0.0
    %90 = vmatpush1.msra.mxu0 0.0
    %91 = vmatprep.subr.mxu0 0.0
    %92 = vmatpush1.msra.mxu0 0.0
    %93 = vmatprep.subr.mxu0 0.0
    %94 = vmatpush1.msra.mxu0 0.0
    %95 = vmatprep.subr.mxu0 0.0
    %96 = vmatpush1.msra.mxu0 0.0
    %97 = vmatprep.subr.mxu0 0.0
    %98 = vmatpush1.msra.mxu0 0.0
    %99 = vmatprep.subr.mxu0 0.0
    %100 = vmatpush1.msra.mxu0 0.0
    %101 = vmatprep.subr.mxu0 0.0
    %102 = vmatpush1.msra.mxu0 0.0
    %103 = vmatprep.subr.mxu0 0.0
    %104 = vmatpush1.msra.mxu0 0.0
    %105 = vmatprep.subr.mxu0 0.0
    %106 = vmatpush1.msra.mxu0 0.0
    %107 = vmatprep.subr.mxu0 0.0
    %108 = vmatpush1.msra.mxu0 0.0
    %109 = vmatprep.subr.mxu0 0.0
    %110 = vmatpush1.msra.mxu0 0.0
    %111 = vmatprep.subr.mxu0 0.0
    %112 = vmatpush1.msra.mxu0 0.0
    %113 = vmatprep.subr.mxu0 0.0
    %114 = vmatpush1.msra.mxu0 0.0
    %115 = vmatprep.subr.mxu0 0.0
    %116 = vmatpush1.msra.mxu0 0.0
    %117 = vmatprep.subr.mxu0 0.0
    %118 = vmatpush1.msra.mxu0 0.0
    %119 = vmatprep.subr.mxu0 0.0
    %120 = vmatpush1.msra.mxu0 0.0
    %121 = vmatprep.subr.mxu0 0.0
    %122 = vmatpush1.msra.mxu0 0.0
    %123 = vmatprep.subr.mxu0 0.0
    %124 = vmatpush1.msra.mxu0 0.0
    %125 = vmatprep.subr.mxu0 0.0
    %126 = vmatpush1.msra.mxu0 0.0
    %127 = vmatprep.subr.mxu0 0.0
    %128 = vmatpush1.msra.mxu0 0.0
    %129 = vmatprep.subr.mxu0 0.0
    %130 = vmatpush1.msra.mxu0 0.0
    %131 = vmatprep.subr.mxu0 0.0
    %132 = vmatpush1.msra.mxu0 0.0
    %133 = vmatprep.subr.mxu0 0.0
    %134 = vmatpush1.msra.mxu0 0.0
    %135 = vmatprep.mubr.f32.mxu0 0.0
    %136 = vmatmul.mubr.f32.gmra.mrb[0].mxu0 %v69
    %v137 = vpop.f32.mrb[0].mxu0
    %v138 = vadd.f32 0.0, %v137
    %v139 = vpop.f32.mrb[0].mxu0
    %140 = vdwg.mxu0
    %v141 = vsel %vm67, %v138, 0.0
    %v142 = vrot.slane %v141, 4
    %v143 = vadd.f32 %v141, %v142
    %v144 = vrot.slane %v143, 2
    %v145 = vadd.f32 %v143, %v144
    %v146 = vrot.slane %v145, 1
    %v147 = vadd.f32 %v145, %v146
    %v148 = vrcp.pop 8.0
    %v149 = vmul.f32 %v147, %v148
    %v150 = vsub.f32 %v138, %v149
    %v151 = vmul.f32 %v150, %v150
    %v152 = vsel %vm67, %v151, 0.0
    %v153 = vrot.slane %v152, 4
    %v154 = vadd.f32 %v152, %v153
    %v155 = vrot.slane %v154, 2
    %v156 = vadd.f32 %v154, %v155
    %v157 = vrot.slane %v156, 1
    %v158 = vadd.f32 %v156, %v157
    %v159 = vmul.f32 %v158, %v148
    %v160 = vadd.f32 %v159, 1e-05
    %v161 = vrsqrt.pop %v160
    %v162 = vmul.f32 %v57, %v161
    %v163 = vmul.f32 %v149, %v162
    %v164 = vsub.f32 %v58, %v163
    %v165 = vlaneseq
    %v166 = vshrl.u32 %v165, 7
    %v167 = vsub.s32 0, %v166
    %v168 = vrot.slane %v162, %v167
    %v169 = vmul.f32 %v138, %v168
    %v170 = vlaneseq
    %v171 = vshrl.u32 %v170, 7
    %v172 = vsub.s32 0, %v171
    %v173 = vrot.slane %v164, %v172
    %v174 = vadd.f32 %v169, %v173
    %v175 = vmax.f32 %v174, 0.0
    %v176 = vld [vmem:[#allocation6] sm:$0xff]
    %v177 = vld [vmem:[#allocation6 + $0x8] sm:$0xff]
    %v178 = vld [vmem:[#allocation6 + $0x10] sm:$0xff]
    %v179 = vld [vmem:[#allocation6 + $0x18] sm:$0xff]
    %v181 = vsel %vm67, %v175, 0
    %183 = vmatprep.subr.mxu0 0.0
    %184 = vmatpush1.msra.mxu0 %v176
    %185 = vmatprep.subr.mxu0 0.0
    %186 = vmatpush1.msra.mxu0 %v177
    %187 = vmatprep.subr.mxu0 0.0
    %188 = vmatpush1.msra.mxu0 %v178
    %189 = vmatprep.subr.mxu0 0.0
    %190 = vmatpush1.msra.mxu0 %v179
    %191 = vmatprep.subr.mxu0 0.0
    %192 = vmatpush1.msra.mxu0 0.0
    %193 = vmatprep.subr.mxu0 0.0
    %194 = vmatpush1.msra.mxu0 0.0
    %195 = vmatprep.subr.mxu0 0.0
    %196 = vmatpush1.msra.mxu0 0.0
    %197 = vmatprep.subr.mxu0 0.0
    %198 = vmatpush1.msra.mxu0 0.0
    %199 = vmatprep.subr.mxu0 0.0
    %200 = vmatpush1.msra.mxu0 0.0
    %201 = vmatprep.subr.mxu0 0.0
    %202 = vmatpush1.msra.mxu0 0.0
    %203 = vmatprep.subr.mxu0 0.0
    %204 = vmatpush1.msra.mxu0 0.0
    %205 = vmatprep.subr.mxu0 0.0
    %206 = vmatpush1.msra.mxu0 0.0
    %207 = vmatprep.subr.mxu0 0.0
    %208 = vmatpush1.msra.mxu0 0.0
    %209 = vmatprep.subr.mxu0 0.0
    %210 = vmatpush1.msra.mxu0 0.0
    %211 = vmatprep.subr.mxu0 0.0
    %212 = vmatpush1.msra.mxu0 0.0
    %213 = vmatprep.subr.mxu0 0.0
    %214 = vmatpush1.msra.mxu0 0.0
    %215 = vmatprep.subr.mxu0 0.0
    %216 = vmatpush1.msra.mxu0 0.0
    %217 = vmatprep.subr.mxu0 0.0
    %218 = vmatpush1.msra.mxu0 0.0
    %219 = vmatprep.subr.mxu0 0.0
    %220 = vmatpush1.msra.mxu0 0.0
    %221 = vmatprep.subr.mxu0 0.0
    %222 = vmatpush1.msra.mxu0 0.0
    %223 = vmatprep.subr.mxu0 0.0
    %224 = vmatpush1.msra.mxu0 0.0
    %225 = vmatprep.subr.mxu0 0.0
    %226 = vmatpush1.msra.mxu0 0.0
    %227 = vmatprep.subr.mxu0 0.0
    %228 = vmatpush1.msra.mxu0 0.0
    %229 = vmatprep.subr.mxu0 0.0
    %230 = vmatpush1.msra.mxu0 0.0
    %231 = vmatprep.subr.mxu0 0.0
    %232 = vmatpush1.msra.mxu0 0.0
    %233 = vmatprep.subr.mxu0 0.0
    %234 = vmatpush1.msra.mxu0 0.0
    %235 = vmatprep.subr.mxu0 0.0
    %236 = vmatpush1.msra.mxu0 0.0
    %237 = vmatprep.subr.mxu0 0.0
    %238 = vmatpush1.msra.mxu0 0.0
    %239 = vmatprep.subr.mxu0 0.0
    %240 = vmatpush1.msra.mxu0 0.0
    %241 = vmatprep.subr.mxu0 0.0
    %242 = vmatpush1.msra.mxu0 0.0
    %243 = vmatprep.subr.mxu0 0.0
    %244 = vmatpush1.msra.mxu0 0.0
    %245 = vmatprep.subr.mxu0 0.0
    %246 = vmatpush1.msra.mxu0 0.0
    %247 = vmatprep.mubr.f32.mxu0 0.0
    %248 = vmatmul.mubr.f32.gmra.mrb[0].mxu0 %v181
    %v249 = vpop.f32.mrb[0].mxu0
    %v250 = vadd.f32 0.0, %v249
    %v251 = vpop.f32.mrb[0].mxu0
    %252 = vdwg.mxu0
    %v253 = vsel %vm67, %v250, 0.0
    %v254 = vrot.slane %v253, 4
    %v255 = vadd.f32 %v253, %v254
    %v256 = vrot.slane %v255, 2
    %v257 = vadd.f32 %v255, %v256
    %v258 = vrot.slane %v257, 1
    %v259 = vadd.f32 %v257, %v258
    %v260 = vmul.f32 %v259, %v148
    %v261 = vsub.f32 %v250, %v260
    %v262 = vmul.f32 %v261, %v261
    %v263 = vsel %vm67, %v262, 0.0
    %v264 = vrot.slane %v263, 4
    %v265 = vadd.f32 %v263, %v264
    %v266 = vrot.slane %v265, 2
    %v267 = vadd.f32 %v265, %v266
    %v268 = vrot.slane %v267, 1
    %v269 = vadd.f32 %v267, %v268
    %v270 = vmul.f32 %v269, %v148
    %v271 = vadd.f32 %v270, 1e-05
    %v272 = vrsqrt.pop %v271
    %v273 = vmul.f32 %v59, %v272
    %v274 = vmul.f32 %v260, %v273
    %v275 = vsub.f32 %v60, %v274
    %v276 = vlaneseq
    %v277 = vshrl.u32 %v276, 7
    %v278 = vsub.s32 0, %v277
    %v279 = vrot.slane %v273, %v278
    %v280 = vmul.f32 %v250, %v279
    %v281 = vlaneseq
    %v282 = vshrl.u32 %v281, 7
    %v283 = vsub.s32 0, %v282
    %v284 = vrot.slane %v275, %v283
    %v285 = vadd.f32 %v280, %v284
    %v286 = vmax.f32 %v285, 0.0
    %v287 = vlaneseq
    %v288 = vshrl.u32 %v287, 7
    %v289 = vsub.s32 0, %v288
    %v290 = vrot.slane %v61, %v289
    %v291 = vmul.f32 %v286, %v290
    %v292 = vsel %vm67, %v291, 0.0
    %293 = vadd.xlane.f32.xlu0 %v292
    %v294 = vpop.xlane.xlu0 %293
    %v295 = vlaneseq
    %v296 = vshrl.u32 %v295, 7
    %v297 = vsub.s32 0, %v296
    %v298 = vrot.slane %v62, %v297
    %v299 = vadd.f32 %v294, %v298
    %vm300 = vcmask 7168
    %301 = vst.msk [vmem:[%s4] sm:$0xff] %vm300, %v299
    // Predicated region
    $region30: #{tpu_custom_call.1} parent=1 // pred_check
      _
    $region31: #{tpu_custom_call.1} parent=1 // pred_check_branch
      %303 = sbr.rel (0) target = $region33
    $region32: #{tpu_custom_call.1} parent=1 // pred_region
      _
    $region33: #{tpu_custom_call.1} parent=1 // pred_fallthru
      _
    // Predicated region
    $region34: #{tpu_custom_call.1} parent=1 // pred_check
      _
    $region35: #{tpu_custom_call.1} parent=1 // pred_check_branch
      %305 = sbr.rel (0) target = $region37
    $region36: #{tpu_custom_call.1} parent=1 // pred_region
      _
    $region37: #{tpu_custom_call.1} parent=1 // pred_fallthru
      _
    %306 = vsyncpa [#allocation3], 1
    %307 = vsyncpa [#allocation5], 1

</llo_original>
